<compile_context>
chip_gen: v5e
topology: v5e:2x2
jax: 0.10.0
libtpu: 0.0.40
codegen_flags: <defaults>
</compile_context>

<pallas_src>
import functools

import jax
import jax.numpy as jnp
from jax.experimental import pallas as pl
from jax.experimental.pallas import tpu as pltpu


def _token_split_kernel(x_ref, w_ref, skip_ref, fac_ref, o_ref):
    # x_ref    : (1, 1, W, Cin)        input row of tokens for (b, h)
    # w_ref    : (1, Cin, nw*E)        weight chunk for sub-row index i
    # skip_ref : (1, 1, 1, W, nw*E)    matching skip block
    # fac_ref  : (1,) in SMEM          scalar lerp factor
    # o_ref    : (1, 1, 1, W, nw*E)    output block
    x = x_ref[0, 0]                                   # (W, Cin)
    w = w_ref[0]                                      # (Cin, nw*E)

    # projection chunk on the MXU, f32 accumulation
    proj = jnp.dot(x, w, preferred_element_type=jnp.float32)     # (W, nw*E)

    skip = skip_ref[0, 0, 0].astype(jnp.float32)                 # (W, nw*E)
    fac = fac_ref[0].astype(jnp.float32)                         # scalar

    # torch.lerp(skip, proj, fac) = skip + fac * (proj - skip)
    out = skip + fac * (proj - skip)
    o_ref[0, 0, 0] = out.astype(o_ref.dtype)


def token_split(x, skip, weight, fac, patch_size=(2, 2)):
    """TokenSplit forward.

    x      : [B, H, W, Cin]                 (tokens, channels-last)
    skip   : [B, H*nh, W*nw, E]             (skip connection at full resolution)
    weight : [E*nh*nw, Cin]                 (torch nn.Linear weight layout)
    fac    : [1]                            (learnable lerp factor)
    returns: [B, H*nh, W*nw, E]
    """
    nh, nw = patch_size
    B, H, W, Cin = x.shape
    N = weight.shape[0]
    E = N // (nh * nw)
    nwE = nw * E

    # Weight: [N, Cin] -> [Cin, N] -> chunk per output sub-row: [nh, Cin, nw*E].
    # (tiny one-time XLA transpose of the weight; activations are never
    #  transposed in HBM)
    w3 = weight.T.reshape(Cin, nh, nwE).transpose(1, 0, 2)

    # skip / out viewed as [B, H, nh, W, nw*E] -- pure contiguous reshapes,
    # this view makes every (b, h, i) chunk of the rearranged output a single
    # rectangular block.
    skip_v = skip.reshape(B, H, nh, W, nwE)

    fac = jnp.asarray(fac, dtype=jnp.float32).reshape((1,))

    out_v = pl.pallas_call(
        _token_split_kernel,
        out_shape=jax.ShapeDtypeStruct((B, H, nh, W, nwE), x.dtype),
        grid_spec=pltpu.PrefetchScalarGridSpec(
            num_scalar_prefetch=0,
            grid=(B, H, nh),
            in_specs=[
                # x row (b, h): reused across the innermost nh axis
                pl.BlockSpec((1, 1, W, Cin), lambda b, h, i: (b, h, 0, 0)),
                # weight chunk for sub-row i
                pl.BlockSpec((1, Cin, nwE), lambda b, h, i: (i, 0, 0)),
                # matching skip block
                pl.BlockSpec((1, 1, 1, W, nwE), lambda b, h, i: (b, h, i, 0, 0)),
                # scalar lerp factor in SMEM
                pl.BlockSpec(memory_space=pltpu.MemorySpace.SMEM),
            ],
            out_specs=pl.BlockSpec((1, 1, 1, W, nwE),
                                   lambda b, h, i: (b, h, i, 0, 0)),
        ),
        compiler_params=pltpu.CompilerParams(
            dimension_semantics=("parallel", "parallel", "parallel")),
    )(x, w3, skip_v, fac)

    # [B, H, nh, W, nw*E] -> [B, H*nh, W*nw, E]  (contiguous merges, free)
    return out_v.reshape(B, H * nh, W * nw, E)


def token_split_ref(x, skip, weight, fac, patch_size=(2, 2)):
    """Pure-JAX reference matching the PyTorch forward exactly."""
    nh, nw = patch_size
    B, H, W, Cin = x.shape
    N = weight.shape[0]
    E = N // (nh * nw)
    proj = jnp.einsum('bhwc,nc->bhwn', x, weight)          # Linear, no bias
    proj = proj.reshape(B, H, W, nh, nw, E)
    proj = proj.transpose(0, 1, 3, 2, 4, 5).reshape(B, H * nh, W * nw, E)
    f = fac.astype(x.dtype)
    return skip + f * (proj - skip)                         # torch.lerp


if __name__ == "__main__":
    B, H, W = 2, 8, 8
    in_features, out_features = 128, 64
    nh, nw = 2, 2

    key = jax.random.PRNGKey(0)
    kx, ks, kw = jax.random.split(key, 3)
    x = jax.random.normal(kx, (B, H, W, in_features), dtype=jnp.float32)
    skip = jax.random.normal(
        ks, (B, H * nh, W * nw, out_features), dtype=jnp.float32)
    weight = 0.05 * jax.random.normal(
        kw, (out_features * nh * nw, in_features), dtype=jnp.float32)
    fac = jnp.ones((1,), jnp.float32) * 0.5   # module init: ones(1) * 0.5

    out = token_split(x, skip, weight, fac, patch_size=(nh, nw))
    out = jax.block_until_ready(out)

    ref = token_split_ref(x, skip, weight, fac, patch_size=(nh, nw))
    assert out.shape == (B, H * nh, W * nw, out_features)
    assert out.dtype == x.dtype
    assert jnp.allclose(out, ref, atol=1e-3, rtol=1e-3), "mismatch vs reference"

    print("KERNEL_OK")
</pallas_src>

<mosaic_0001>
module attributes {stable_mosaic.version = 11 : i64} {
  func.func @_token_split_kernel(%arg0: i32, %arg1: i32, %arg2: i32, %arg3: memref<1x1x8x128xf32, #tpu.memory_space<vmem>>, %arg4: memref<1x128x128xf32, #tpu.memory_space<vmem>>, %arg5: memref<1x1x1x8x128xf32, #tpu.memory_space<vmem>>, %arg6: memref<1xf32, #tpu.memory_space<smem>>, %arg7: memref<1x1x1x8x128xf32, #tpu.memory_space<vmem>>) attributes {dimension_semantics = [#tpu.dimension_semantics<parallel>, #tpu.dimension_semantics<parallel>, #tpu.dimension_semantics<parallel>], iteration_bounds = array<i64: 2, 8, 2>, scalar_prefetch = 0 : i64, scratch_operands = 0 : i64, tpu.core_type = #tpu.core_type<tc>, window_params = [{transform_indices = @transform_0, window_bounds = array<i64: 1, 1, 8, 128>}, {transform_indices = @transform_1, window_bounds = array<i64: 1, 128, 128>}, {transform_indices = @transform_2, window_bounds = array<i64: 1, 1, 1, 8, 128>}, {transform_indices = @transform_3, window_bounds = array<i64: 1>}, {transform_indices = @transform_4, window_bounds = array<i64: 1, 1, 1, 8, 128>}]} {
    %c0 = arith.constant 0 : index
    %c0_0 = arith.constant 0 : index
    %c0_1 = arith.constant 0 : index
    %c0_2 = arith.constant 0 : index
    %0 = vector.load %arg3[%c0, %c0_0, %c0_1, %c0_2] : memref<1x1x8x128xf32, #tpu.memory_space<vmem>>, vector<1x1x8x128xf32>
    %1 = vector.shape_cast %0 : vector<1x1x8x128xf32> to vector<8x128xf32>
    %c0_3 = arith.constant 0 : index
    %c0_4 = arith.constant 0 : index
    %c0_5 = arith.constant 0 : index
    %2 = vector.load %arg4[%c0_3, %c0_4, %c0_5] : memref<1x128x128xf32, #tpu.memory_space<vmem>>, vector<1x128x128xf32>
    %3 = vector.shape_cast %2 : vector<1x128x128xf32> to vector<128x128xf32>
    %cst = arith.constant dense<0.000000e+00> : vector<8x128xf32>
    %4 = tpu.matmul %1, %3, %cst {dimension_numbers = #tpu.dot_dimension_numbers<[1], [0], [0], [1], [0, 0, 1, 1], [], []>} : vector<8x128xf32>, vector<128x128xf32>, vector<8x128xf32> -> vector<8x128xf32>
    %c0_6 = arith.constant 0 : index
    %c0_7 = arith.constant 0 : index
    %c0_8 = arith.constant 0 : index
    %c0_9 = arith.constant 0 : index
    %c0_10 = arith.constant 0 : index
    %5 = vector.load %arg5[%c0_6, %c0_7, %c0_8, %c0_9, %c0_10] : memref<1x1x1x8x128xf32, #tpu.memory_space<vmem>>, vector<1x1x1x8x128xf32>
    %6 = vector.shape_cast %5 : vector<1x1x1x8x128xf32> to vector<8x128xf32>
    %c0_11 = arith.constant 0 : index
    %7 = memref.load %arg6[%c0_11] : memref<1xf32, #tpu.memory_space<smem>>
    %8 = arith.subf %4, %6 : vector<8x128xf32>
    %9 = vector.broadcast %7 : f32 to vector<8x128xf32>
    %10 = arith.mulf %9, %8 : vector<8x128xf32>
    %11 = arith.addf %6, %10 : vector<8x128xf32>
    %c0_12 = arith.constant 0 : index
    %c0_13 = arith.constant 0 : index
    %c0_14 = arith.constant 0 : index
    %c0_15 = arith.constant 0 : index
    %c0_16 = arith.constant 0 : index
    %12 = vector.load %arg7[%c0_12, %c0_13, %c0_14, %c0_15, %c0_16] : memref<1x1x1x8x128xf32, #tpu.memory_space<vmem>>, vector<1x1x1x8x128xf32>
    %13 = vector.shape_cast %12 : vector<1x1x1x8x128xf32> to vector<8x128xf32>
    %14 = vector.shape_cast %11 : vector<8x128xf32> to vector<1x1x1x8x128xf32>
    tpu.vector_store %arg7[%c0_12, %c0_13, %c0_14, %c0_15, %c0_16], %14 {strides = array<i32>} : memref<1x1x1x8x128xf32, #tpu.memory_space<vmem>>, vector<1x1x1x8x128xf32>,
    return
  }
  func.func @transform_0(%arg0: i32, %arg1: i32, %arg2: i32) -> (i32, i32, i32, i32) {
    %c0_i32 = arith.constant 0 : i32
    %c0_i32_0 = arith.constant 0 : i32
    %c0_i32_1 = arith.constant 0 : i32
    return %arg0, %arg1, %c0_i32, %c0_i32_0 : i32, i32, i32, i32
  }
  func.func @transform_1(%arg0: i32, %arg1: i32, %arg2: i32) -> (i32, i32, i32) {
    %c0_i32 = arith.constant 0 : i32
    %c0_i32_0 = arith.constant 0 : i32
    %c0_i32_1 = arith.constant 0 : i32
    return %arg2, %c0_i32, %c0_i32_0 : i32, i32, i32
  }
  func.func @transform_2(%arg0: i32, %arg1: i32, %arg2: i32) -> (i32, i32, i32, i32, i32) {
    %c0_i32 = arith.constant 0 : i32
    %c0_i32_0 = arith.constant 0 : i32
    %c0_i32_1 = arith.constant 0 : i32
    return %arg0, %arg1, %arg2, %c0_i32, %c0_i32_0 : i32, i32, i32, i32, i32
  }
  func.func @transform_3(%arg0: i32, %arg1: i32, %arg2: i32) -> i32 {
    %c0_i32 = arith.constant 0 : i32
    %c0_i32_0 = arith.constant 0 : i32
    return %c0_i32 : i32
  }
  func.func @transform_4(%arg0: i32, %arg1: i32, %arg2: i32) -> (i32, i32, i32, i32, i32) {
    %c0_i32 = arith.constant 0 : i32
    %c0_i32_0 = arith.constant 0 : i32
    %c0_i32_1 = arith.constant 0 : i32
    return %arg0, %arg1, %arg2, %c0_i32, %c0_i32_0 : i32, i32, i32, i32, i32
  }
}

</mosaic_0001>

<llo_original>
// kernel: tpu_custom_call.1
$region0: #{tpu_custom_call.1}
  #allocation0 [shape = 'u32[]', space=smem, size = 0x4, offset = 0x4, fixed_abs, tag = 'smem constant byte address 0x4 - core index']
  #allocation1 [shape = 'u32[72,128]{1,0:T(1,128)}', space=vmem, size = 0x9000, scoped, tag = 'internal scratch']
  #allocation2 [shape = 'f32[1]{0:T(128)S(6)}', space=smem, size = 0x200, scoped, tag = 'scoped memory for tpu_custom_call.1']
  %s0 = inlined_call_operand.hbm [shape: f32[2,8,8,128], index: 0, kind: input, shape index: {}]
  %s1 = inlined_call_operand.hbm [shape: f32[2,128,128], index: 1, kind: input, shape index: {}]
  %s2 = inlined_call_operand.hbm [shape: f32[2,8,2,8,128], index: 2, kind: input, shape index: {}]
  %s3 = inlined_call_operand.<no memory space> [shape: f32[1], index: 3, kind: input, shape index: {}]
  %s4 = inlined_call_operand.hbm [shape: f32[2,8,2,8,128], index: 4, kind: output, shape index: {}]
  %s5 = sld [smem:[#allocation0]]
  $region61: #{tpu_custom_call.1} parent=0
    _
  %s7 = ssub.s32 1, %s5
  %s8 = scalar_select 0, %s7, %s5
  %9 = sst [smem:[#allocation2]] %s3
  $region1: #{tpu_custom_call.1} parent=0
    #allocation3 [shape = 'u8[8192]{0}', space=vmem, size = 0x2000, scoped, tag = 'input window, operand 0']
    #allocation4 [shape = 's32[2]{0}', space=sflag, size = 0x8, scoped, tag = 'scoped memory for tpu_custom_call.1']
    #allocation5 [shape = 's32[2]{0}', space=sflag, size = 0x8, scoped, tag = 'scoped memory for tpu_custom_call.1']
    #allocation6 [shape = 'u8[131072]{0}', space=vmem, size = 0x20000, scoped, tag = 'input window, operand 1']
    #allocation7 [shape = 's32[2]{0}', space=sflag, size = 0x8, scoped, tag = 'scoped memory for tpu_custom_call.1']
    #allocation8 [shape = 'u8[8192]{0}', space=vmem, size = 0x2000, scoped, tag = 'input window, operand 2']
    #allocation9 [shape = 'u8[8192]{0}', space=vmem, size = 0x2000, scoped, tag = 'output window, operand 0']
    %10 = vsyncpa [#allocation4], 0
    %s11 = scalar_lea.sflag [#allocation4], 1
    %12 = vsyncpa %s11, 0
    %13 = vsyncpa [#allocation7], 0
    %s14 = scalar_lea.sflag [#allocation7], 1
    %15 = vsyncpa %s14, 0
    %16 = vsyncpa [#allocation5], 0
    %s17 = scalar_lea.sflag [#allocation5], 1
    %18 = vsyncpa %s17, 0
    loop: start=0, step=1, limit=34
    $region2: #{tpu_custom_call.1} parent=1 // loop_pre_header
      _
    $region3: #{tpu_custom_call.1} parent=1 // loop_header
      %s20 = sphi 0, %s24
      %p21 = scmp.ge.s32.totalorder %s20, 34
      %s27 = sphi 0, %s46
      %s28 = sphi 0, %s42
      %s29 = sphi 0, %s38
      %s30 = sphi 0, %s27
      %s31 = sphi 0, %s28
      %s32 = sphi 0, %s29
      %s33 = sphi 0, %s30
      %s34 = sphi 0, %s31
      %s35 = sphi 0, %s32
      %s51 = sphi 0, %s53
      %s54 = sphi 0, %s51
      %s55 = sphi 0, %s54
      %s71 = sphi 0, %s55
      %s77 = sphi 0, %s79
      %s80 = sphi 0, %s77
      %s81 = sphi 0, %s80
      %s97 = sphi 0, %s81
      %s107 = sphi 0, %s109
      %s110 = sphi 0, %s107
      %s111 = sphi 0, %s110
      %s127 = sphi 0, %s111
      %s131 = sphi 0, %s131
      %s133 = sphi 0, %s131
      %s134 = sphi 0, %s133
      %s148 = sphi 0, %s134
      %s158 = sphi 0, %s160
      %s161 = sphi 0, %s158
      %s162 = sphi 0, %s161
      %s178 = sphi 0, %s162
    $region4: #{tpu_custom_call.1} parent=1 // loop_header_branch
      %23 = sbr.rel (%p21) target = $region8
    $region5: #{tpu_custom_call.1} parent=1 // loop_body
      %s25 = ssub.s32 %s20, 1
      %s26 = ssub.s32 %s20, 2
      %s36 = sadd.s32 1, %s29
      %p37 = scmp.ge.s32.totalorder %s36, 2
      %s38 = scalar_select %p37, 0, %s36
      %s39 = sadd.s32 1, %s28
      %s40 = scalar_select %p37, %s39, %s28
      %p41 = scmp.ge.s32.totalorder %s40, 8
      %s42 = scalar_select %p41, 0, %s40
      %s43 = sadd.s32 1, %s27
      %s44 = scalar_select %p41, %s43, %s27
      %p45 = scmp.ge.s32.totalorder %s44, 2
      %s46 = scalar_select %p45, 0, %s44
      %s47 = ssub.s32 %s27, %s46
      %s48 = ssub.s32 %s28, %s42
      %s49 = sor.u32 %s47, %s48
      %p50 = scmp.eq.s32.totalorder %s49, 0
      %s52 = sadd.s32 %s51, 1
      %s53 = scalar_select %p50, %s51, %s52
      %p56 = pneg %p50
      %p57 = scmp.eq.s32.totalorder %s20, 31
      %p58 = por %p56, %p57
      %p59 = scmp.ne.s32.totalorder %s51, %s54
      %p60 = scmp.eq.s32.totalorder %s20, 0
      %p61 = por %p59, %p60
      %p62 = scmp.ne.s32.totalorder %s51, %s54
      %p63 = scmp.eq.s32.totalorder %s25, 31
      %p64 = por %p62, %p63
      %p65 = scmp.ne.s32.totalorder %s54, %s55
      %p66 = scmp.eq.s32.totalorder %s25, 0
      %p67 = por %p65, %p66
      %p68 = scmp.ne.s32.totalorder %s54, %s55
      %p69 = scmp.eq.s32.totalorder %s26, 31
      %p70 = por %p68, %p69
      %p72 = scmp.ne.s32.totalorder %s55, %s71
      %p73 = scmp.eq.s32.totalorder %s26, 0
      %p74 = por %p72, %p73
      %s75 = ssub.s32 %s29, %s38
      %p76 = scmp.eq.s32.totalorder %s75, 0
      %s78 = sadd.s32 %s77, 1
      %s79 = scalar_select %p76, %s77, %s78
      %p82 = pneg %p76
      %p83 = scmp.eq.s32.totalorder %s20, 31
      %p84 = por %p82, %p83
      %p85 = scmp.ne.s32.totalorder %s77, %s80
      %p86 = scmp.eq.s32.totalorder %s20, 0
      %p87 = por %p85, %p86
      %p88 = scmp.ne.s32.totalorder %s77, %s80
      %p89 = scmp.eq.s32.totalorder %s25, 31
      %p90 = por %p88, %p89
      %p91 = scmp.ne.s32.totalorder %s80, %s81
      %p92 = scmp.eq.s32.totalorder %s25, 0
      %p93 = por %p91, %p92
      %p94 = scmp.ne.s32.totalorder %s80, %s81
      %p95 = scmp.eq.s32.totalorder %s26, 31
      %p96 = por %p94, %p95
      %p98 = scmp.ne.s32.totalorder %s81, %s97
      %p99 = scmp.eq.s32.totalorder %s26, 0
      %p100 = por %p98, %p99
      %s101 = ssub.s32 %s27, %s46
      %s102 = ssub.s32 %s28, %s42
      %s103 = sor.u32 %s101, %s102
      %s104 = ssub.s32 %s29, %s38
      %s105 = sor.u32 %s103, %s104
      %p106 = scmp.eq.s32.totalorder %s105, 0
      %s108 = sadd.s32 %s107, 1
      %s109 = scalar_select %p106, %s107, %s108
      %p112 = pneg %p106
      %p113 = scmp.eq.s32.totalorder %s20, 31
      %p114 = por %p112, %p113
      %p115 = scmp.ne.s32.totalorder %s107, %s110
      %p116 = scmp.eq.s32.totalorder %s20, 0
      %p117 = por %p115, %p116
      %p118 = scmp.ne.s32.totalorder %s107, %s110
      %p119 = scmp.eq.s32.totalorder %s25, 31
      %p120 = por %p118, %p119
      %p121 = scmp.ne.s32.totalorder %s110, %s111
      %p122 = scmp.eq.s32.totalorder %s25, 0
      %p123 = por %p121, %p122
      %p124 = scmp.ne.s32.totalorder %s110, %s111
      %p125 = scmp.eq.s32.totalorder %s26, 31
      %p126 = por %p124, %p125
      %p128 = scmp.ne.s32.totalorder %s111, %s127
      %p129 = scmp.eq.s32.totalorder %s26, 0
      %p130 = por %p128, %p129
      %s132 = sadd.s32 %s131, 1
      %p135 = scmp.eq.s32.totalorder %s20, 31
      %p136 = scmp.ne.s32.totalorder %s131, %s133
      %p137 = scmp.eq.s32.totalorder %s20, 0
      %p138 = por %p136, %p137
      %p139 = scmp.ne.s32.totalorder %s131, %s133
      %p140 = scmp.eq.s32.totalorder %s25, 31
      %p141 = por %p139, %p140
      %p142 = scmp.ne.s32.totalorder %s133, %s134
      %p143 = scmp.eq.s32.totalorder %s25, 0
      %p144 = por %p142, %p143
      %p145 = scmp.ne.s32.totalorder %s133, %s134
      %p146 = scmp.eq.s32.totalorder %s26, 31
      %p147 = por %p145, %p146
      %p149 = scmp.ne.s32.totalorder %s134, %s148
      %p150 = scmp.eq.s32.totalorder %s26, 0
      %p151 = por %p149, %p150
      %s152 = ssub.s32 %s27, %s46
      %s153 = ssub.s32 %s28, %s42
      %s154 = sor.u32 %s152, %s153
      %s155 = ssub.s32 %s29, %s38
      %s156 = sor.u32 %s154, %s155
      %p157 = scmp.eq.s32.totalorder %s156, 0
      %s159 = sadd.s32 %s158, 1
      %s160 = scalar_select %p157, %s158, %s159
      %p163 = pneg %p157
      %p164 = scmp.eq.s32.totalorder %s20, 31
      %p165 = por %p163, %p164
      %p166 = scmp.ne.s32.totalorder %s158, %s161
      %p167 = scmp.eq.s32.totalorder %s20, 0
      %p168 = por %p166, %p167
      %p169 = scmp.ne.s32.totalorder %s158, %s161
      %p170 = scmp.eq.s32.totalorder %s25, 31
      %p171 = por %p169, %p170
      %p172 = scmp.ne.s32.totalorder %s161, %s162
      %p173 = scmp.eq.s32.totalorder %s25, 0
      %p174 = por %p172, %p173
      %p175 = scmp.ne.s32.totalorder %s161, %s162
      %p176 = scmp.eq.s32.totalorder %s26, 31
      %p177 = por %p175, %p176
      %p179 = scmp.ne.s32.totalorder %s162, %s178
      %p180 = scmp.eq.s32.totalorder %s26, 0
      %p181 = por %p179, %p180
      %p182 = scmp.le.s32.totalorder 1, %s20
      %p183 = scmp.lt.s32.totalorder %s20, 33
      %p184 = pnand %p182, %p183
      %p185 = pneg %p184
      // Predicated region
      $region9: #{tpu_custom_call.1} parent=5 // pred_check
        _
      $region10: #{tpu_custom_call.1} parent=5 // pred_check_branch
        %187 = sbr.rel (%p184) target = $region12
      $region11: #{tpu_custom_call.1} parent=5 // pred_region
        %s188 = ssub.s32 %s20, 1
        // Predicated region
        $region13: #{tpu_custom_call.1} parent=11 // pred_check
          %p189 = pneg %p144
        $region14: #{tpu_custom_call.1} parent=11 // pred_check_branch
          %191 = sbr.rel (%p189) target = $region16
        $region15: #{tpu_custom_call.1} parent=11 // pred_region
          _
        $region16: #{tpu_custom_call.1} parent=11 // pred_fallthru
          _
      $region12: #{tpu_custom_call.1} parent=5 // pred_fallthru
        _
      %p192 = scmp.lt.s32.totalorder %s20, 32
      // Predicated region
      $region17: #{tpu_custom_call.1} parent=5 // pred_check
        %p193 = pneg %p192
      $region18: #{tpu_custom_call.1} parent=5 // pred_check_branch
        %195 = sbr.rel (%p193) target = $region20
      $region19: #{tpu_custom_call.1} parent=5 // pred_region
        // Predicated region
        $region21: #{tpu_custom_call.1} parent=19 // pred_check
          %p196 = pneg %p61
        $region22: #{tpu_custom_call.1} parent=19 // pred_check_branch
          %198 = sbr.rel (%p196) target = $region24
        $region23: #{tpu_custom_call.1} parent=19 // pred_region
          %s199 = sand.u32 %s51, 1
          %s200 = scalar_lea.sflag [#allocation4], %s199
          %s201 = sand.u32 %s51, 1
          %s202 = smul.addr %s201, 8
          %s203 = scalar_lea.vmem [#allocation3], %s202
          %205 = vsyncadd %s200, 0
          %s206 = smul.addr %s27, 8
          %s207 = sadd.s32 %s28, %s206
          %s208 = smul.addr %s207, 8
          %s209 = scalar_lea.hbm %s0, %s208
          %s211 = sshll.u32 %s209, 4
          %s212 = int_to_ptr.hbm [resolvable:$true] %s211
          %s213 = sshll.u32 %s203, 4
          %s214 = int_to_ptr.vmem [resolvable:$true] %s213
          %216 = dma.hbm_to_vmem [thread:$0]  %s212, 128, %s214, %s200
        $region24: #{tpu_custom_call.1} parent=19 // pred_fallthru
          _
        // Predicated region
        $region25: #{tpu_custom_call.1} parent=19 // pred_check
          %p217 = pneg %p87
        $region26: #{tpu_custom_call.1} parent=19 // pred_check_branch
          %219 = sbr.rel (%p217) target = $region28
        $region27: #{tpu_custom_call.1} parent=19 // pred_region
          %s220 = sand.u32 %s20, 1
          %s221 = scalar_lea.sflag [#allocation7], %s220
          %s222 = sand.u32 %s77, 1
          %s223 = smul.addr %s222, 128
          %s224 = scalar_lea.vmem [#allocation6], %s223
          %226 = vsyncadd %s221, 0
          %s227 = smul.addr %s29, 16
          %s228 = smul.addr %s227, 8
          %s229 = scalar_lea.hbm %s1, %s228
          %s230 = sshll.u32 %s229, 4
          %s231 = int_to_ptr.hbm [resolvable:$true] %s230
          %s232 = sshll.u32 %s224, 4
          %s233 = int_to_ptr.vmem [resolvable:$true] %s232
          %238 = dma.hbm_to_vmem [thread:$0]  %s231, 2048, %s233, %s221, 128, 128, 8
        $region28: #{tpu_custom_call.1} parent=19 // pred_fallthru
          _
        // Predicated region
        $region29: #{tpu_custom_call.1} parent=19 // pred_check
          %p239 = pneg %p117
        $region30: #{tpu_custom_call.1} parent=19 // pred_check_branch
          %241 = sbr.rel (%p239) target = $region32
        $region31: #{tpu_custom_call.1} parent=19 // pred_region
          %s242 = sand.u32 %s20, 1
          %s243 = scalar_lea.sflag [#allocation7], %s242
          %s244 = sand.u32 %s107, 1
          %s245 = smul.addr %s244, 8
          %s246 = scalar_lea.vmem [#allocation8], %s245
          %248 = vsyncadd %s243, 0
          %s249 = smul.addr %s28, 2
          %s250 = sadd.s32 %s29, %s249
          %s251 = smul.addr %s27, 16
          %s252 = sadd.s32 %s250, %s251
          %s253 = smul.addr %s252, 8
          %s254 = scalar_lea.hbm %s2, %s253
          %s256 = sshll.u32 %s254, 4
          %s257 = int_to_ptr.hbm [resolvable:$true] %s256
          %s258 = sshll.u32 %s246, 4
          %s259 = int_to_ptr.vmem [resolvable:$true] %s258
          %261 = dma.hbm_to_vmem [thread:$0]  %s257, 128, %s259, %s243
        $region32: #{tpu_custom_call.1} parent=19 // pred_fallthru
          _
      $region20: #{tpu_custom_call.1} parent=5 // pred_fallthru
        _
      %p262 = scmp.le.s32.totalorder 1, %s20
      %p263 = scmp.lt.s32.totalorder %s20, 33
      %p264 = pnand %p262, %p263
      %p265 = pneg %p264
      // Predicated region
      $region33: #{tpu_custom_call.1} parent=5 // pred_check
        _
      $region34: #{tpu_custom_call.1} parent=5 // pred_check_branch
        %267 = sbr.rel (%p264) target = $region36
      $region35: #{tpu_custom_call.1} parent=5 // pred_region
        %s268 = ssub.s32 %s20, 1
        %s269 = sand.u32 %s54, 1
        %s270 = scalar_lea.sflag [#allocation4], %s269
        %s271 = sand.u32 %s54, 1
        %s272 = smul.addr %s271, 8
        %s273 = scalar_lea.vmem [#allocation3], %s272
        // Predicated region
        $region37: #{tpu_custom_call.1} parent=35 // pred_check
          %p274 = pneg %p67
        $region38: #{tpu_custom_call.1} parent=35 // pred_check_branch
          %276 = sbr.rel (%p274) target = $region40
        $region39: #{tpu_custom_call.1} parent=35 // pred_region
          %278 = dma.done %s270, 128
        $region40: #{tpu_custom_call.1} parent=35 // pred_fallthru
          _
        %s279 = sand.u32 %s25, 1
        %s280 = scalar_lea.sflag [#allocation7], %s279
        %s281 = sand.u32 %s80, 1
        %s282 = smul.addr %s281, 128
        %s283 = scalar_lea.vmem [#allocation6], %s282
        // Predicated region
        $region41: #{tpu_custom_call.1} parent=35 // pred_check
          %p284 = pneg %p93
        $region42: #{tpu_custom_call.1} parent=35 // pred_check_branch
          %286 = sbr.rel (%p284) target = $region44
        $region43: #{tpu_custom_call.1} parent=35 // pred_region
          %288 = dma.done %s280, 2048
        $region44: #{tpu_custom_call.1} parent=35 // pred_fallthru
          _
        %s289 = sand.u32 %s25, 1
        %s290 = scalar_lea.sflag [#allocation7], %s289
        %s291 = sand.u32 %s110, 1
        %s292 = smul.addr %s291, 8
        %s293 = scalar_lea.vmem [#allocation8], %s292
        // Predicated region
        $region45: #{tpu_custom_call.1} parent=35 // pred_check
          %p294 = pneg %p123
        $region46: #{tpu_custom_call.1} parent=35 // pred_check_branch
          %296 = sbr.rel (%p294) target = $region48
        $region47: #{tpu_custom_call.1} parent=35 // pred_region
          %298 = dma.done %s290, 128
        $region48: #{tpu_custom_call.1} parent=35 // pred_fallthru
          _
        %s299 = sand.u32 %s54, 1
        %s300 = scalar_lea.sflag [#allocation4], %s299
        %s301 = sand.u32 %s54, 1
        %s302 = smul.addr %s301, 8
        %s303 = scalar_lea.vmem [#allocation3], %s302
        %p304 = pneg %p67
        %p305 = pneg %p64
        %s306 = sand.u32 %s25, 1
        %s307 = scalar_lea.sflag [#allocation7], %s306
        %s308 = sand.u32 %s80, 1
        %s309 = smul.addr %s308, 128
        %s310 = scalar_lea.vmem [#allocation6], %s309
        %p311 = pneg %p93
        %p312 = pneg %p90
        %s313 = sand.u32 %s25, 1
        %s314 = scalar_lea.sflag [#allocation7], %s313
        %s315 = sand.u32 %s110, 1
        %s316 = smul.addr %s315, 8
        %s317 = scalar_lea.vmem [#allocation8], %s316
        %p318 = pneg %p123
        %p319 = pneg %p120
        %p320 = pneg %p144
        %p321 = pneg %p141
        %p322 = pneg %p174
        %p323 = pneg %p171
        %s324 = sand.u32 %s161, 1
        %s325 = scalar_lea.sflag [#allocation5], %s324
        %s326 = sand.u32 %s161, 1
        %s327 = smul.addr %s326, 8
        %s328 = scalar_lea.vmem [#allocation9], %s327
        %v329 = vld [vmem:[%s273] sm:$0xff]
        %v330 = vld [vmem:[%s283] sm:$0xff]
        %v331 = vld [vmem:[%s283 + $0x8] sm:$0xff]
        %v332 = vld [vmem:[%s283 + $0x10] sm:$0xff]
        %v333 = vld [vmem:[%s283 + $0x18] sm:$0xff]
        %v334 = vld [vmem:[%s283 + $0x20] sm:$0xff]
        %v335 = vld [vmem:[%s283 + $0x28] sm:$0xff]
        %v336 = vld [vmem:[%s283 + $0x30] sm:$0xff]
        %v337 = vld [vmem:[%s283 + $0x38] sm:$0xff]
        %v338 = vld [vmem:[%s283 + $0x40] sm:$0xff]
        %v339 = vld [vmem:[%s283 + $0x48] sm:$0xff]
        %v340 = vld [vmem:[%s283 + $0x50] sm:$0xff]
        %v341 = vld [vmem:[%s283 + $0x58] sm:$0xff]
        %v342 = vld [vmem:[%s283 + $0x60] sm:$0xff]
        %v343 = vld [vmem:[%s283 + $0x68] sm:$0xff]
        %v344 = vld [vmem:[%s283 + $0x70] sm:$0xff]
        %v345 = vld [vmem:[%s283 + $0x78] sm:$0xff]
        %346 = vmatpush.msra.mxu0 %v345
        %347 = vmatpush.msra.mxu0 %v344
        %348 = vmatpush.msra.mxu0 %v343
        %349 = vmatpush.msra.mxu0 %v342
        %350 = vmatpush.msra.mxu0 %v341
        %351 = vmatpush.msra.mxu0 %v340
        %352 = vmatpush.msra.mxu0 %v339
        %353 = vmatpush.msra.mxu0 %v338
        %354 = vmatpush.msra.mxu0 %v337
        %355 = vmatpush.msra.mxu0 %v336
        %356 = vmatpush.msra.mxu0 %v335
        %357 = vmatpush.msra.mxu0 %v334
        %358 = vmatpush.msra.mxu0 %v333
        %359 = vmatpush.msra.mxu0 %v332
        %360 = vmatpush.msra.mxu0 %v331
        %361 = vmatpush.msra.mxu0 %v330
        %362 = vmatmul.f32.gmra.mxu0 %v329
        %v363 = vpop.f32.mrf.mxu0
        %v364 = vadd.f32 0.0, %v363
        %365 = vdwg.mxu0
        %v366 = vld [vmem:[%s293] sm:$0xff]
        %s367 = sld [smem:[#allocation2]]
        %v368 = vsub.f32 %v364, %v366
        %v369 = vstv %s367
        %v370 = vmul.f32 %v369, %v368
        %v371 = vadd.f32 %v366, %v370
        %372 = vst [vmem:[%s328] sm:$0xff] %v371
        %s373 = sand.u32 %s161, 1
        %s374 = scalar_lea.sflag [#allocation5], %s373
        %s375 = sand.u32 %s161, 1
        %s376 = smul.addr %s375, 8
        %s377 = scalar_lea.vmem [#allocation9], %s376
        // Predicated region
        $region49: #{tpu_custom_call.1} parent=35 // pred_check
          %p378 = pneg %p171
        $region50: #{tpu_custom_call.1} parent=35 // pred_check_branch
          %380 = sbr.rel (%p378) target = $region52
        $region51: #{tpu_custom_call.1} parent=35 // pred_region
          %382 = vsyncadd %s374, 0
          %s383 = smul.addr %s31, 2
          %s384 = sadd.s32 %s32, %s383
          %s385 = smul.addr %s30, 16
          %s386 = sadd.s32 %s384, %s385
          %s387 = smul.addr %s386, 8
          %s388 = scalar_lea.hbm %s4, %s387
          %s390 = sshll.u32 %s377, 4
          %s391 = int_to_ptr.vmem [resolvable:$true] %s390
          %s392 = sshll.u32 %s388, 4
          %s393 = int_to_ptr.hbm [resolvable:$true] %s392
          %395 = dma.vmem_to_hbm [thread:$0]  %s391, 128, %s393, %s374
        $region52: #{tpu_custom_call.1} parent=35 // pred_fallthru
          _
      $region36: #{tpu_custom_call.1} parent=5 // pred_fallthru
        _
      %p396 = scmp.le.s32.totalorder 2, %s20
      // Predicated region
      $region53: #{tpu_custom_call.1} parent=5 // pred_check
        %p397 = pneg %p396
      $region54: #{tpu_custom_call.1} parent=5 // pred_check_branch
        %399 = sbr.rel (%p397) target = $region56
      $region55: #{tpu_custom_call.1} parent=5 // pred_region
        %s400 = ssub.s32 %s20, 2
        // Predicated region
        $region57: #{tpu_custom_call.1} parent=55 // pred_check
          %p401 = pneg %p177
        $region58: #{tpu_custom_call.1} parent=55 // pred_check_branch
          %403 = sbr.rel (%p401) target = $region60
        $region59: #{tpu_custom_call.1} parent=55 // pred_region
          %s404 = sand.u32 %s162, 1
          %s405 = scalar_lea.sflag [#allocation5], %s404
          %s406 = sand.u32 %s162, 1
          %s407 = smul.addr %s406, 8
          %s408 = scalar_lea.vmem [#allocation9], %s407
          %410 = dma.done %s405, 128
        $region60: #{tpu_custom_call.1} parent=55 // pred_fallthru
          _
      $region56: #{tpu_custom_call.1} parent=5 // pred_fallthru
        _
    $region6: #{tpu_custom_call.1} parent=1 // loop_footer
      %s24 = sadd.s32 1, %s20
    $region7: #{tpu_custom_call.1} parent=1 // loop_footer_branch
      %19 = sbr.rel target = $region3
    $region8: #{tpu_custom_call.1} parent=1 // loop_exit
      _
    %411 = vsyncpa [#allocation4], 1
    %s412 = scalar_lea.sflag [#allocation4], 1
    %413 = vsyncpa %s412, 1
    %414 = vsyncpa [#allocation7], 1
    %s415 = scalar_lea.sflag [#allocation7], 1
    %416 = vsyncpa %s415, 1
    %417 = vsyncpa [#allocation5], 1
    %s418 = scalar_lea.sflag [#allocation5], 1
    %419 = vsyncpa %s418, 1

</llo_original>
